<compile_context>
chip_gen: v6e
topology: v6e:2x2x1
jax: 0.10.0
libtpu: 0.0.40
codegen_flags: <defaults>
</compile_context>

<pallas_src>
import jax
import jax.numpy as jnp
from jax import lax
from jax.experimental import pallas as pl
from jax.experimental.pallas import tpu as pltpu


def _proto_dist_kernel(p_ref, yy_ref, x_ref, o_ref):
    # p_ref : (P, C)  prototypes pre-scaled by -2, resident across the grid
    # yy_ref: (1, P)  prototype squared norms, resident
    # x_ref : (TM, C) batch tile, pipelined/double-buffered
    # o_ref : (TM, P) output tile (natural layout; masked lane stores are
    #                 hidden under the input DMA)
    x = x_ref[...]
    # -2 * x . p^T via the MXU (the -2 is already folded into p_ref).
    dot = lax.dot_general(
        x,
        p_ref[...],
        dimension_numbers=(((1,), (1,)), ((), ())),
        preferred_element_type=jnp.float32,
    )                                                   # (TM, P)
    xx = jnp.sum(x * x, axis=-1, keepdims=True)          # (TM, 1), VPU/XLU
    o_ref[...] = (xx + yy_ref[...] + dot).astype(o_ref.dtype)


def _round_up(a, b):
    return ((a + b - 1) // b) * b


def prototype_layer_forward(x, prototypes, *, tm=8192):
    """Equivalent of PrototypeLayer.forward / list_of_distances.

    x:          (N, C) float32
    prototypes: (P, C) float32
    returns:    (N, P) float32 squared Euclidean distances
    """
    n, c = x.shape
    p, c2 = prototypes.shape
    assert c == c2, "feature dims must match"

    x = x.astype(jnp.float32)
    prototypes = prototypes.astype(jnp.float32)

    # Tiny (P, C)/(1, P) precompute — no extra HBM pass over x.
    p_scaled = -2.0 * prototypes                                  # (P, C)
    yy = jnp.sum(prototypes * prototypes, axis=1)[None, :]        # (1, P)

    # Batch tile: multiple of 8 sublanes, no larger than the (rounded) batch.
    n8 = _round_up(n, 8)
    tm = max(8, min(tm, n8))
    # If the batch is big enough to split but would fit in one grid step,
    # halve the tile so v7x's two TensorCores both get work.
    if n8 >= 2048 and pl.cdiv(n, tm) < 2:
        tm = max(8, _round_up(pl.cdiv(n8, 2), 8))

    grid = (pl.cdiv(n, tm),)

    out = pl.pallas_call(
        _proto_dist_kernel,
        out_shape=jax.ShapeDtypeStruct((n, p), jnp.float32),
        grid=grid,
        in_specs=[
            # Prototypes (-2 scaled): one small resident block.
            pl.BlockSpec((p, c), lambda i: (0, 0)),
            # Prototype norms: one tiny resident block.
            pl.BlockSpec((1, p), lambda i: (0, 0)),
            # x: (TM, C) tile per grid step, pipelined; ragged last block is
            # handled by Pallas (OOB reads never reach a stored row).
            pl.BlockSpec((tm, c), lambda i: (i, 0)),
        ],
        # Natural (TM, P) output layout; OOB rows of the last block are masked.
        out_specs=pl.BlockSpec((tm, p), lambda i: (i, 0)),
        compiler_params=pltpu.CompilerParams(
            dimension_semantics=("parallel",),   # 2-TC sharding on v7x
            vmem_limit_bytes=32 * 1024 * 1024,
        ),
        cost_estimate=pl.CostEstimate(
            flops=2 * n * p * c,
            transcendentals=0,
            bytes_accessed=(n * c + p * c + n * p) * 4,
        ),
    )(p_scaled, yy, x)

    # Note: like the PyTorch reference, tiny negative values from cancellation
    # in ||x||^2 + ||p||^2 - 2 x.p are NOT clamped (exact parity).
    return out


if __name__ == "__main__":
    key = jax.random.PRNGKey(0)
    k_x, k_p = jax.random.split(key)

    # Module defaults: in_channels=10, n_prototypes=15.
    in_channels = 10
    n_prototypes = 15
    batch = 8

    prototypes = jax.random.uniform(
        k_p, (n_prototypes, in_channels), dtype=jnp.float32
    )
    x = jax.random.normal(k_x, (batch, in_channels), dtype=jnp.float32)

    out = prototype_layer_forward(x, prototypes)
    out = jax.block_until_ready(out)

    # Reference check (plain JAX, same math as the PyTorch module).
    xx = jnp.sum(x**2, axis=1, keepdims=True)
    yy = jnp.sum(prototypes**2, axis=1)[None, :]
    ref = xx + yy - 2.0 * x @ prototypes.T
    assert out.shape == (batch, n_prototypes)
    assert jnp.allclose(out, ref, atol=1e-4, rtol=1e-4)

    print("KERNEL_OK")
</pallas_src>

<mosaic_0001>
module attributes {stable_mosaic.version = 11 : i64} {
  func.func @_proto_dist_kernel(%arg0: i32, %arg1: memref<15x10xf32, #tpu.memory_space<vmem>>, %arg2: memref<1x15xf32, #tpu.memory_space<vmem>>, %arg3: memref<8x10xf32, #tpu.memory_space<vmem>>, %arg4: memref<8x15xf32, #tpu.memory_space<vmem>>) attributes {dimension_semantics = [#tpu.dimension_semantics<parallel>], iteration_bounds = array<i64: 1>, scalar_prefetch = 0 : i64, scratch_operands = 0 : i64, tpu.core_type = #tpu.core_type<tc>, window_params = [{pipeline_mode = #tpu.pipeline_mode<synchronous>, transform_indices = @transform_0, window_bounds = array<i64: 15, 10>}, {pipeline_mode = #tpu.pipeline_mode<synchronous>, transform_indices = @transform_1, window_bounds = array<i64: 1, 15>}, {transform_indices = @transform_2, window_bounds = array<i64: 8, 10>}, {transform_indices = @transform_3, window_bounds = array<i64: 8, 15>}]} {
    %c0 = arith.constant 0 : index
    %c0_0 = arith.constant 0 : index
    %0 = vector.load %arg3[%c0, %c0_0] : memref<8x10xf32, #tpu.memory_space<vmem>>, vector<8x10xf32>
    %c0_1 = arith.constant 0 : index
    %c0_2 = arith.constant 0 : index
    %1 = vector.load %arg1[%c0_1, %c0_2] : memref<15x10xf32, #tpu.memory_space<vmem>>, vector<15x10xf32>
    %cst = arith.constant dense<0.000000e+00> : vector<8x15xf32>
    %2 = tpu.matmul %0, %1, %cst {dimension_numbers = #tpu.dot_dimension_numbers<[1], [1], [0], [0], [0, 0, 1, 0], [], []>} : vector<8x10xf32>, vector<15x10xf32>, vector<8x15xf32> -> vector<8x15xf32>
    %3 = arith.mulf %0, %0 : vector<8x10xf32>
    %cst_3 = arith.constant dense<0.000000e+00> : vector<8xf32>
    %4 = vector.multi_reduction <add>, %3, %cst_3 [1] : vector<8x10xf32> to vector<8xf32>
    %5 = vector.shape_cast %4 : vector<8xf32> to vector<8x1xf32>
    %c0_4 = arith.constant 0 : index
    %c0_5 = arith.constant 0 : index
    %6 = vector.load %arg2[%c0_4, %c0_5] : memref<1x15xf32, #tpu.memory_space<vmem>>, vector<1x15xf32>
    %7 = vector.broadcast %5 : vector<8x1xf32> to vector<8x15xf32>
    %8 = vector.broadcast %6 : vector<1x15xf32> to vector<8x15xf32>
    %9 = arith.addf %7, %8 : vector<8x15xf32>
    %10 = arith.addf %9, %2 : vector<8x15xf32>
    %c0_6 = arith.constant 0 : index
    %c0_7 = arith.constant 0 : index
    %11 = vector.load %arg4[%c0_6, %c0_7] : memref<8x15xf32, #tpu.memory_space<vmem>>, vector<8x15xf32>
    tpu.vector_store %arg4[%c0_6, %c0_7], %10 {strides = array<i32>} : memref<8x15xf32, #tpu.memory_space<vmem>>, vector<8x15xf32>,
    return
  }
  func.func @transform_0(%arg0: i32) -> (i32, i32) {
    %c0_i32 = arith.constant 0 : i32
    %c0_i32_0 = arith.constant 0 : i32
    %c0_i32_1 = arith.constant 0 : i32
    return %c0_i32, %c0_i32_0 : i32, i32
  }
  func.func @transform_1(%arg0: i32) -> (i32, i32) {
    %c0_i32 = arith.constant 0 : i32
    %c0_i32_0 = arith.constant 0 : i32
    %c0_i32_1 = arith.constant 0 : i32
    return %c0_i32, %c0_i32_0 : i32, i32
  }
  func.func @transform_2(%arg0: i32) -> (i32, i32) {
    %c0_i32 = arith.constant 0 : i32
    %c0_i32_0 = arith.constant 0 : i32
    return %arg0, %c0_i32 : i32, i32
  }
  func.func @transform_3(%arg0: i32) -> (i32, i32) {
    %c0_i32 = arith.constant 0 : i32
    %c0_i32_0 = arith.constant 0 : i32
    return %arg0, %c0_i32 : i32, i32
  }
}

</mosaic_0001>

<llo_original>
// kernel: tpu_custom_call.1
$region0: #{tpu_custom_call.1}
  #allocation0 [shape = 'u32[]', space=smem, size = 0x4, offset = 0x4, fixed_abs, tag = 'smem constant byte address 0x4 - core index']
  #allocation1 [shape = 'u32[144,128]{1,0:T(1,128)}', space=vmem, size = 0x12000, scoped, tag = 'internal scratch']
  %s0 = inlined_call_operand.hbm [shape: f32[15,10], index: 0, kind: input, shape index: {}]
  %s1 = inlined_call_operand.vmem [shape: f32[1,15], index: 1, kind: input, shape index: {}]
  %s2 = inlined_call_operand.hbm [shape: f32[8,10], index: 2, kind: input, shape index: {}]
  %s3 = inlined_call_operand.hbm [shape: f32[8,15], index: 3, kind: output, shape index: {}]
  %s4 = sld [smem:[#allocation0]]
  $region30: #{tpu_custom_call.1} parent=0
    _
  %s6 = ssub.s32 1, %s4
  %s7 = scalar_select 0, %s6, %s4
  $region1: #{tpu_custom_call.1} parent=0
    #allocation2 [shape = 'u8[8192]{0}', space=vmem, size = 0x2000, scoped, tag = 'input window, operand 0, single buffered']
    #allocation3 [shape = 's32[1]{0}', space=sflag, size = 0x4, scoped, tag = 'scoped memory for tpu_custom_call.1']
    #allocation4 [shape = 's32[1]{0}', space=sflag, size = 0x4, scoped, tag = 'scoped memory for tpu_custom_call.1']
    #allocation5 [shape = 'u8[4096]{0}', space=vmem, size = 0x1000, scoped, tag = 'input window, operand 2, single buffered']
    #allocation6 [shape = 's32[1]{0}', space=sflag, size = 0x4, scoped, tag = 'scoped memory for tpu_custom_call.1']
    #allocation7 [shape = 'u8[4096]{0}', space=vmem, size = 0x1000, scoped, tag = 'output window, operand 0, single buffered']
    %8 = vsyncpa [#allocation3], 0
    %9 = vsyncpa [#allocation6], 0
    %10 = vsyncpa [#allocation4], 0
    // Predicated region
    $region2: #{tpu_custom_call.1} parent=1 // pred_check
      _
    $region3: #{tpu_custom_call.1} parent=1 // pred_check_branch
      %12 = sbr.rel (0) target = $region5
    $region4: #{tpu_custom_call.1} parent=1 // pred_region
      %s14 = ssub.s32 256, 256
      %15 = vsyncadd [#allocation3], %s14
      %s16 = sshll.u32 [#allocation2], 4
      %s17 = int_to_ptr.vmem [resolvable:$true] %s16
      %22 = dma.hbm_to_vmem [thread:$0]  %s0, 256, %s17, [#allocation3], 128, 128, 8
    $region5: #{tpu_custom_call.1} parent=1 // pred_fallthru
      _
    // Predicated region
    $region6: #{tpu_custom_call.1} parent=1 // pred_check
      _
    $region7: #{tpu_custom_call.1} parent=1 // pred_check_branch
      %24 = sbr.rel (0) target = $region9
    $region8: #{tpu_custom_call.1} parent=1 // pred_region
      _
    $region9: #{tpu_custom_call.1} parent=1 // pred_fallthru
      _
    // Predicated region
    $region10: #{tpu_custom_call.1} parent=1 // pred_check
      _
    $region11: #{tpu_custom_call.1} parent=1 // pred_check_branch
      %26 = sbr.rel (0) target = $region13
    $region12: #{tpu_custom_call.1} parent=1 // pred_region
      %s28 = ssub.s32 128, 128
      %29 = vsyncadd [#allocation6], %s28
      %s31 = sshll.u32 [#allocation5], 4
      %s32 = int_to_ptr.vmem [resolvable:$true] %s31
      %34 = dma.hbm_to_vmem [thread:$0]  %s2, 128, %s32, [#allocation6]
    $region13: #{tpu_custom_call.1} parent=1 // pred_fallthru
      _
    // Predicated region
    $region14: #{tpu_custom_call.1} parent=1 // pred_check
      _
    $region15: #{tpu_custom_call.1} parent=1 // pred_check_branch
      %36 = sbr.rel (0) target = $region17
    $region16: #{tpu_custom_call.1} parent=1 // pred_region
      %37 = dma.done [#allocation3], 256
    $region17: #{tpu_custom_call.1} parent=1 // pred_fallthru
      _
    // Predicated region
    $region18: #{tpu_custom_call.1} parent=1 // pred_check
      _
    $region19: #{tpu_custom_call.1} parent=1 // pred_check_branch
      %39 = sbr.rel (0) target = $region21
    $region20: #{tpu_custom_call.1} parent=1 // pred_region
      %40 = dma.done [#allocation6], 128
    $region21: #{tpu_custom_call.1} parent=1 // pred_fallthru
      _
    %v41 = vld [vmem:[#allocation5] sm:$0xff]
    %v42 = vld [vmem:[#allocation2] sm:$0xff]
    %v43 = vld [vmem:[#allocation2 + $0x8] sm:$0x7f]
    %vm44 = vcmask 80896
    %v46 = vsel %vm44, %v41, 0
    %v49 = vsel %vm44, %v42, 0
    %v52 = vsel %vm44, %v43, 0
    %54 = vmatprep.subr.mxu0 0.0
    %55 = vmatpush1.xpose.msra.mxu0 0.0
    %56 = vmatprep.subr.mxu0 0.0
    %57 = vmatpush1.xpose.msra.mxu0 0.0
    %58 = vmatprep.subr.mxu0 0.0
    %59 = vmatpush1.xpose.msra.mxu0 0.0
    %60 = vmatprep.subr.mxu0 0.0
    %61 = vmatpush1.xpose.msra.mxu0 0.0
    %62 = vmatprep.subr.mxu0 0.0
    %63 = vmatpush1.xpose.msra.mxu0 0.0
    %64 = vmatprep.subr.mxu0 0.0
    %65 = vmatpush1.xpose.msra.mxu0 0.0
    %66 = vmatprep.subr.mxu0 0.0
    %67 = vmatpush1.xpose.msra.mxu0 0.0
    %68 = vmatprep.subr.mxu0 0.0
    %69 = vmatpush1.xpose.msra.mxu0 0.0
    %70 = vmatprep.subr.mxu0 0.0
    %71 = vmatpush1.xpose.msra.mxu0 0.0
    %72 = vmatprep.subr.mxu0 0.0
    %73 = vmatpush1.xpose.msra.mxu0 0.0
    %74 = vmatprep.subr.mxu0 0.0
    %75 = vmatpush1.xpose.msra.mxu0 0.0
    %76 = vmatprep.subr.mxu0 0.0
    %77 = vmatpush1.xpose.msra.mxu0 0.0
    %78 = vmatprep.subr.mxu0 0.0
    %79 = vmatpush1.xpose.msra.mxu0 0.0
    %80 = vmatprep.subr.mxu0 0.0
    %81 = vmatpush1.xpose.msra.mxu0 0.0
    %82 = vmatprep.subr.mxu0 0.0
    %83 = vmatpush1.xpose.msra.mxu0 %v52
    %84 = vmatprep.subr.mxu0 0.0
    %85 = vmatpush1.xpose.msra.mxu0 %v49
    %86 = vmatprep.subr.mxu0 0.0
    %87 = vmatpush2.xpose.msra.mxu0 0.0
    %88 = vmatprep.subr.mxu0 0.0
    %89 = vmatpush2.xpose.msra.mxu0 0.0
    %90 = vmatprep.subr.mxu0 0.0
    %91 = vmatpush2.xpose.msra.mxu0 0.0
    %92 = vmatprep.subr.mxu0 0.0
    %93 = vmatpush2.xpose.msra.mxu0 0.0
    %94 = vmatprep.subr.mxu0 0.0
    %95 = vmatpush2.xpose.msra.mxu0 0.0
    %96 = vmatprep.subr.mxu0 0.0
    %97 = vmatpush2.xpose.msra.mxu0 0.0
    %98 = vmatprep.subr.mxu0 0.0
    %99 = vmatpush2.xpose.msra.mxu0 0.0
    %100 = vmatprep.subr.mxu0 0.0
    %101 = vmatpush2.xpose.msra.mxu0 0.0
    %102 = vmatprep.subr.mxu0 0.0
    %103 = vmatpush2.xpose.msra.mxu0 0.0
    %104 = vmatprep.subr.mxu0 0.0
    %105 = vmatpush2.xpose.msra.mxu0 0.0
    %106 = vmatprep.subr.mxu0 0.0
    %107 = vmatpush2.xpose.msra.mxu0 0.0
    %108 = vmatprep.subr.mxu0 0.0
    %109 = vmatpush2.xpose.msra.mxu0 0.0
    %110 = vmatprep.subr.mxu0 0.0
    %111 = vmatpush2.xpose.msra.mxu0 0.0
    %112 = vmatprep.subr.mxu0 0.0
    %113 = vmatpush2.xpose.msra.mxu0 0.0
    %114 = vmatprep.subr.mxu0 0.0
    %115 = vmatpush2.xpose.msra.mxu0 0.0
    %116 = vmatprep.subr.mxu0 0.0
    %117 = vmatpush2.xpose.msra.mxu0 0.0
    %118 = vmatprep.mubr.f32.mxu0 0.0
    %119 = vmatmul.mubr.f32.gmra.mxu0 %v46
    %v120 = vpop.f32.mrf.mxu0
    %v121 = vadd.f32 0.0, %v120
    %v122 = vpop.f32.mrf.mxu0
    %123 = vdwg.mxu0
    %v124 = vmul.f32 %v41, %v41
    %v125 = vsel %vm44, %v124, 0.0
    %126 = vadd.xlane.f32.xlu0 %v125
    %v127 = vpop.xlane.xlu0 %126
    %v128 = vld [vmem:[%s1] sm:$0x1]
    %v130 = vlaneseq
    %v131 = vshrl.u32 %v130, 7
    %v132 = vsub.s32 0, %v131
    %v133 = vrot.slane %v128, %v132
    %v135 = vadd.f32 %v127, %v133
    %v136 = vadd.f32 %v135, %v121
    %vm137 = vcmask 121856
    %138 = vst.msk [vmem:[#allocation7] sm:$0xff] %vm137, %v136
    // Predicated region
    $region22: #{tpu_custom_call.1} parent=1 // pred_check
      _
    $region23: #{tpu_custom_call.1} parent=1 // pred_check_branch
      %140 = sbr.rel (0) target = $region25
    $region24: #{tpu_custom_call.1} parent=1 // pred_region
      %s142 = ssub.s32 128, 128
      %143 = vsyncadd [#allocation4], %s142
      %s145 = sshll.u32 [#allocation7], 4
      %s146 = int_to_ptr.vmem [resolvable:$true] %s145
      %148 = dma.vmem_to_hbm [thread:$0]  %s146, 128, %s3, [#allocation4]
    $region25: #{tpu_custom_call.1} parent=1 // pred_fallthru
      _
    // Predicated region
    $region26: #{tpu_custom_call.1} parent=1 // pred_check
      _
    $region27: #{tpu_custom_call.1} parent=1 // pred_check_branch
      %150 = sbr.rel (0) target = $region29
    $region28: #{tpu_custom_call.1} parent=1 // pred_region
      %151 = dma.done [#allocation4], 128
    $region29: #{tpu_custom_call.1} parent=1 // pred_fallthru
      _
    %152 = vsyncpa [#allocation3], 1
    %153 = vsyncpa [#allocation6], 1
    %154 = vsyncpa [#allocation4], 1

</llo_original>
